<compile_context>
chip_gen: v7x
topology: tpu7x:2x2x1
jax: 0.10.0
libtpu: 0.0.40
codegen_flags: <defaults>
</compile_context>

<pallas_src>
import jax
import jax.numpy as jnp
import numpy as np
from jax import lax
from jax.experimental import pallas as pl
from jax.experimental.pallas import tpu as pltpu


def _elu(v):
    # ELU, alpha = 1.0 (PyTorch default).
    return jnp.where(v > 0, v, jnp.exp(jnp.minimum(v, 0.0)) - 1.0)


def _make_kernel(b_block, c, l_block, pad_col, compute_dtype):
    """pad_col: in-tile column index of the real sequence end (conv3's h2
    zero-padding position) when L was padded up, else None."""
    f32 = jnp.float32
    cdt = compute_dtype

    def kernel(x_ref, e_ref, w1_ref, w2_ref, b2_ref, w3_ref, o_ref):
        # x_ref : (b_block, C, l_block)  lane-dense main x tile (f32)
        # e_ref : (b_block, 1, C, 4)     halo cols [ts-2, ts-1, ts+lb, ts+lb+1]
        # w1_ref: (2C, 3C)  conv1, taps stacked on the contraction dim  (cdt)
        # w2_ref: (3C, 2C)  conv2 k=1                                   (cdt)
        # b2_ref: (3C, 1)   conv2 bias                                  (f32)
        # w3_ref: (3C, 3C)  conv3, taps stacked on the output rows      (cdt)
        # o_ref : (b_block, C, l_block)
        lb = pl.program_id(1)
        n_lb = pl.num_programs(1)
        w1 = w1_ref[...]
        w2 = w2_ref[...]
        b2 = b2_ref[...]
        w3 = w3_ref[...]

        # cast x once for the conv path (the residual re-reads x_ref in f32)
        xs = [x_ref[b].astype(cdt) for b in range(b_block)]      # (C, l_block)
        eg = [e_ref[b, 0].astype(cdt) for b in range(b_block)]   # (C, 4)

        def merge(parts):
            return parts[0] if len(parts) == 1 else jnp.concatenate(parts, axis=1)

        # ---- conv1 (k=3, pad=1, no bias): three taps fused into ONE matmul.
        # xcat rows [tC:(t+1)C] hold x[:, j + t - 1]; per-sample segment
        # boundary columns are patched with the pre-gathered edge columns.
        x_m1 = merge([jnp.concatenate([eg[b][:, 1:2], xs[b][:, :l_block - 1]], axis=1)
                      for b in range(b_block)])
        x_p1 = merge([jnp.concatenate([xs[b][:, 1:], eg[b][:, 2:3]], axis=1)
                      for b in range(b_block)])
        xcat = jnp.concatenate([x_m1, merge(xs), x_p1], axis=0)   # (3C, W) cdt

        h1 = _elu(jnp.dot(w1, xcat, preferred_element_type=f32))  # (2C, W)

        # ---- conv2 (k=1, bias)
        h2 = _elu(jnp.dot(w2, h1.astype(cdt),
                          preferred_element_type=f32) + b2)       # (3C, W)
        if pad_col is not None:
            # L was padded: conv3 zero-pads h2 at the real sequence end
            # (global column == L); that column lives inside the last tile.
            col = lax.broadcasted_iota(jnp.int32, (1, b_block * l_block), 1) % l_block
            h2 = jnp.where((lb == n_lb - 1) & (col == pad_col), 0.0, h2)
        h2c = h2.astype(cdt)

        # ---- conv3 halo: h2 at per-tile positions -1 and l_block, recomputed
        # from the edge columns (2 tiny columns per sample).
        halo = []
        for b in range(b_block):
            halo.append(jnp.concatenate(                 # left halo (pos ts-1)
                [eg[b][:, 0:1], eg[b][:, 1:2], xs[b][:, 0:1]], axis=0))
            halo.append(jnp.concatenate(                 # right halo (pos ts+lb)
                [xs[b][:, l_block - 1:l_block], eg[b][:, 2:3], eg[b][:, 3:4]],
                axis=0))
        xcat_h = merge(halo)                                       # (3C, 2*bb)
        h1_h = _elu(jnp.dot(w1, xcat_h, preferred_element_type=f32))
        h2_h = _elu(jnp.dot(w2, h1_h.astype(cdt),
                            preferred_element_type=f32) + b2)      # (3C, 2*bb)
        # halo columns that fall on the global conv3 zero padding (position -1
        # on the first tile / position l_pad on the last tile) must be zero.
        hcol = lax.broadcasted_iota(jnp.int32, (1, 2 * b_block), 1)
        is_left = (hcol % 2) == 0
        kill = ((lb == 0) & is_left) | ((lb == n_lb - 1) & jnp.logical_not(is_left))
        h2_h = jnp.where(kill, 0.0, h2_h).astype(cdt)

        # ---- conv3 (k=3, pad=1, no bias): ONE fused matmul (taps stacked on
        # output rows); the +/-1 shift is applied to the small C-row outputs.
        y = jnp.dot(w3, h2c, preferred_element_type=f32)           # (3C, W)
        yh = jnp.dot(w3, h2_h, preferred_element_type=f32)         # (3C, 2*bb)

        for b in range(b_block):                   # light per-sample epilogue
            s = b * l_block
            yb = y[:, s:s + l_block]
            t0 = jnp.concatenate(                  # tap0 uses h2[:, j-1]
                [yh[0:c, 2 * b:2 * b + 1], yb[0:c, :l_block - 1]], axis=1)
            t2 = jnp.concatenate(                  # tap2 uses h2[:, j+1]
                [yb[2 * c:3 * c, 1:], yh[2 * c:3 * c, 2 * b + 1:2 * b + 2]], axis=1)
            h3 = _elu(t0 + yb[c:2 * c] + t2)                       # (C, l_block)
            # ---- residual (identity kept in full f32)
            o_ref[b] = (h3 + x_ref[b]).astype(o_ref.dtype)

    return kernel


def basic_block1d(x_ncl, w1, w2, b2, w3, *, compute_dtype=jnp.bfloat16,
                  l_block=None, b_block=None):
    """x_ncl: (N, C, L).  Weights in PyTorch Conv1d layout:
       w1: (2C, C, 3), w2: (3C, 2C, 1), b2: (3C,), w3: (C, 3C, 3)."""
    N, C, L = x_ncl.shape
    assert L >= 2, "sequence length must be >= 2"
    cdt = compute_dtype
    f32 = jnp.float32

    # ---- generation-aware VMEM budget --------------------------------------
    try:
        phys_vmem = int(pltpu.get_tpu_info().vmem_capacity_bytes)
    except Exception:
        phys_vmem = 64 * 2**20               # v7x per-core physical (smallest)
    vmem_limit = int(min(phys_vmem * 0.7, 100 * 2**20))
    tile_budget = min(vmem_limit // 2, 24 * 2**20)

    # ---- L tiling (channel-aware; pad to a 128 multiple when needed) -------
    lmax = 1024 if C <= 32 else (512 if C <= 128 else 256)
    if l_block is None:
        if L <= lmax:
            l_block = L
        else:
            l128 = -(-L // 128) * 128
            l_block = 128
            for cand in (1024, 512, 256):
                if cand <= lmax and l128 % cand == 0:
                    l_block = cand
                    break
    assert l_block >= 2
    n_lb = -(-L // l_block)
    l_pad = n_lb * l_block

    # ---- batch blocking (amortize ~0.35us/grid-step at small shapes) -------
    wbytes = 21 * C * C * jnp.dtype(cdt).itemsize * 2 + 12 * C

    def _est(bb):                 # rough per-step VMEM (tiles + intermediates)
        return 4 * bb * C * l_block * 4 + 44 * C * bb * l_block + wbytes

    if b_block is None:
        b_block = 1
        for cand in range(min(N, 8), 1, -1):
            if N % cand:
                continue
            if _est(cand) > tile_budget:
                continue
            if (N // cand) * n_lb < 2:   # keep >= 2 grid steps (v7x: 2 TCs)
                continue
            b_block = cand
            break
    assert N % b_block == 0

    # ---- tiny halo-edge gather (4 columns per L-tile; no full HBM pass) ----
    ts = np.arange(n_lb) * l_block
    idx = np.stack([ts - 2, ts - 1, ts + l_block, ts + l_block + 1], axis=1)
    valid = (idx >= 0) & (idx < L)
    edges = jnp.take(x_ncl, jnp.asarray(np.clip(idx, 0, L - 1).reshape(-1)), axis=2)
    edges = edges.reshape(N, C, n_lb, 4)
    edges = edges * jnp.asarray(valid, dtype=x_ncl.dtype)[None, None]
    edges = jnp.transpose(edges, (0, 2, 1, 3))            # (N, n_lb, C, 4)

    x_in = x_ncl if l_pad == L else jnp.pad(x_ncl, ((0, 0), (0, 0), (0, l_pad - L)))
    pad_col = None if l_pad == L else (L % l_block)

    # ---- weights: fused-tap layouts, MXU compute dtype ---------------------
    w1f = jnp.transpose(w1, (0, 2, 1)).reshape(2 * C, 3 * C).astype(cdt)
    w2f = w2[:, :, 0].astype(cdt)
    b2f = b2.reshape(3 * C, 1).astype(f32)
    w3f = jnp.transpose(w3, (2, 0, 1)).reshape(3 * C, 3 * C).astype(cdt)

    kernel = _make_kernel(b_block, C, l_block, pad_col, cdt)

    out = pl.pallas_call(
        kernel,
        out_shape=jax.ShapeDtypeStruct((N, C, l_pad), x_ncl.dtype),
        grid_spec=pltpu.PrefetchScalarGridSpec(
            num_scalar_prefetch=0,
            grid=(N // b_block, n_lb),
            in_specs=[
                pl.BlockSpec((b_block, C, l_block), lambda n, l: (n, 0, l)),
                pl.BlockSpec((b_block, 1, C, 4), lambda n, l: (n, l, 0, 0)),
                pl.BlockSpec((2 * C, 3 * C), lambda n, l: (0, 0)),
                pl.BlockSpec((3 * C, 2 * C), lambda n, l: (0, 0)),
                pl.BlockSpec((3 * C, 1), lambda n, l: (0, 0)),
                pl.BlockSpec((3 * C, 3 * C), lambda n, l: (0, 0)),
            ],
            out_specs=pl.BlockSpec((b_block, C, l_block), lambda n, l: (n, 0, l)),
        ),
        compiler_params=pltpu.CompilerParams(
            dimension_semantics=("parallel", "parallel"),
            vmem_limit_bytes=vmem_limit),
    )(x_in, edges, w1f, w2f, b2f, w3f)
    return out if l_pad == L else out[:, :, :L]


def _reference(x_ncl, w1, w2, b2, w3):
    """Pure-JAX reference matching torch semantics (cross-correlation)."""
    dn = ("NCH", "OIH", "NCH")
    prec = lax.Precision.HIGHEST

    def conv(x, w, pad):
        return lax.conv_general_dilated(
            x, w, window_strides=(1,), padding=((pad, pad),),
            dimension_numbers=dn, precision=prec)

    h = _elu(conv(x_ncl, w1, 1))
    h = _elu(conv(h, w2, 0) + b2[None, :, None])
    h = _elu(conv(h, w3, 1))
    return h + x_ncl


if __name__ == "__main__":
    def run_case(N, C, L, compute_dtype, atol, rtol, **kw):
        key = jax.random.PRNGKey(0)
        kx, k1, k2, kb, k3 = jax.random.split(key, 5)
        x = jax.random.normal(kx, (N, C, L), dtype=jnp.float32)
        w1 = 0.1 * jax.random.normal(k1, (2 * C, C, 3), dtype=jnp.float32)
        w2 = 0.1 * jax.random.normal(k2, (3 * C, 2 * C, 1), dtype=jnp.float32)
        b2 = 0.1 * jax.random.normal(kb, (3 * C,), dtype=jnp.float32)
        w3 = 0.1 * jax.random.normal(k3, (C, 3 * C, 3), dtype=jnp.float32)

        out = jax.block_until_ready(
            basic_block1d(x, w1, w2, b2, w3, compute_dtype=compute_dtype, **kw))
        ref = _reference(x, w1, w2, b2, w3)
        assert out.shape == (N, C, L)
        err = float(jnp.max(jnp.abs(out - ref)))
        assert jnp.allclose(out, ref, atol=atol, rtol=rtol), (
            f"mismatch vs reference: N={N} C={C} L={L} dtype={compute_dtype} "
            f"max|err|={err}")

    # Small canonical shape (single L tile), f32 conv path.
    run_case(2, 8, 16, jnp.float32, 1e-3, 1e-3)
    # Same shape on the default bf16-MXU path.
    run_case(2, 8, 16, jnp.bfloat16, 7.5e-2, 5e-2)
    # Longer sequence with an explicit 512-wide tile: exercises the cross-tile
    # halo path, lane-merged batch (b_block=2) and the bf16 MXU path.
    run_case(2, 16, 1024, jnp.bfloat16, 7.5e-2, 5e-2, l_block=512)
    # L with no friendly divisor: exercises the pad-to-tile-multiple fallback
    # (incl. in-kernel masking of conv3's padding column), kept in f32.
    run_case(2, 16, 600, jnp.float32, 1e-3, 1e-3, l_block=256)

    print("KERNEL_OK")
</pallas_src>

<mosaic_0001>
module attributes {stable_mosaic.version = 11 : i64} {
  func.func @kernel(%arg0: i32, %arg1: i32, %arg2: memref<1x8x16xf32, #tpu.memory_space<vmem>>, %arg3: memref<1x1x8x4xf32, #tpu.memory_space<vmem>>, %arg4: memref<16x24xf32, #tpu.memory_space<vmem>>, %arg5: memref<24x16xf32, #tpu.memory_space<vmem>>, %arg6: memref<24x1xf32, #tpu.memory_space<vmem>>, %arg7: memref<24x24xf32, #tpu.memory_space<vmem>>, %arg8: memref<1x8x16xf32, #tpu.memory_space<vmem>>) attributes {dimension_semantics = [#tpu.dimension_semantics<parallel>, #tpu.dimension_semantics<parallel>], iteration_bounds = array<i64: 2, 1>, scalar_prefetch = 0 : i64, scratch_operands = 0 : i64, tpu.core_type = #tpu.core_type<tc>, window_params = [{transform_indices = @transform_0, window_bounds = array<i64: 1, 8, 16>}, {transform_indices = @transform_1, window_bounds = array<i64: 1, 1, 8, 4>}, {pipeline_mode = #tpu.pipeline_mode<synchronous>, transform_indices = @transform_2, window_bounds = array<i64: 16, 24>}, {pipeline_mode = #tpu.pipeline_mode<synchronous>, transform_indices = @transform_3, window_bounds = array<i64: 24, 16>}, {pipeline_mode = #tpu.pipeline_mode<synchronous>, transform_indices = @transform_4, window_bounds = array<i64: 24, 1>}, {pipeline_mode = #tpu.pipeline_mode<synchronous>, transform_indices = @transform_5, window_bounds = array<i64: 24, 24>}, {transform_indices = @transform_6, window_bounds = array<i64: 1, 8, 16>}]} {
    %c0 = arith.constant 0 : index
    %c0_0 = arith.constant 0 : index
    %0 = vector.load %arg4[%c0, %c0_0] : memref<16x24xf32, #tpu.memory_space<vmem>>, vector<16x24xf32>
    %c0_1 = arith.constant 0 : index
    %c0_2 = arith.constant 0 : index
    %1 = vector.load %arg5[%c0_1, %c0_2] : memref<24x16xf32, #tpu.memory_space<vmem>>, vector<24x16xf32>
    %c0_3 = arith.constant 0 : index
    %c0_4 = arith.constant 0 : index
    %2 = vector.load %arg6[%c0_3, %c0_4] : memref<24x1xf32, #tpu.memory_space<vmem>>, vector<24x1xf32>
    %c0_5 = arith.constant 0 : index
    %c0_6 = arith.constant 0 : index
    %3 = vector.load %arg7[%c0_5, %c0_6] : memref<24x24xf32, #tpu.memory_space<vmem>>, vector<24x24xf32>
    %c0_7 = arith.constant 0 : index
    %c0_8 = arith.constant 0 : index
    %c0_9 = arith.constant 0 : index
    %4 = vector.load %arg2[%c0_7, %c0_8, %c0_9] : memref<1x8x16xf32, #tpu.memory_space<vmem>>, vector<1x8x16xf32>
    %5 = vector.shape_cast %4 : vector<1x8x16xf32> to vector<8x16xf32>
    %c0_10 = arith.constant 0 : index
    %c0_11 = arith.constant 0 : index
    %c0_12 = arith.constant 0 : index
    %c0_13 = arith.constant 0 : index
    %6 = vector.load %arg3[%c0_10, %c0_11, %c0_12, %c0_13] : memref<1x1x8x4xf32, #tpu.memory_space<vmem>>, vector<1x1x8x4xf32>
    %7 = vector.shape_cast %6 : vector<1x1x8x4xf32> to vector<8x4xf32>
    %8 = vector.extract_strided_slice %7 {offsets = [0, 1], sizes = [8, 1], strides = [1, 1]} : vector<8x4xf32> to vector<8x1xf32>
    %9 = vector.extract_strided_slice %5 {offsets = [0, 0], sizes = [8, 15], strides = [1, 1]} : vector<8x16xf32> to vector<8x15xf32>
    %10 = tpu.concatenate %8, %9 in 1 : vector<8x1xf32>, vector<8x15xf32> -> vector<8x16xf32>
    %11 = vector.extract_strided_slice %5 {offsets = [0, 1], sizes = [8, 15], strides = [1, 1]} : vector<8x16xf32> to vector<8x15xf32>
    %12 = vector.extract_strided_slice %7 {offsets = [0, 2], sizes = [8, 1], strides = [1, 1]} : vector<8x4xf32> to vector<8x1xf32>
    %13 = tpu.concatenate %11, %12 in 1 : vector<8x15xf32>, vector<8x1xf32> -> vector<8x16xf32>
    %14 = tpu.concatenate %10, %5, %13 in 0 : vector<8x16xf32>, vector<8x16xf32>, vector<8x16xf32> -> vector<24x16xf32>
    %cst = arith.constant dense<0.000000e+00> : vector<16x16xf32>
    %15 = tpu.matmul %0, %14, %cst {dimension_numbers = #tpu.dot_dimension_numbers<[1], [0], [0], [1], [0, 0, 1, 1], [], []>} : vector<16x24xf32>, vector<24x16xf32>, vector<16x16xf32> -> vector<16x16xf32>
    %cst_14 = arith.constant 0.000000e+00 : f32
    %16 = vector.broadcast %cst_14 : f32 to vector<16x16xf32>
    %17 = arith.cmpf ogt, %15, %16 : vector<16x16xf32>
    %cst_15 = arith.constant 0.000000e+00 : f32
    %18 = vector.broadcast %cst_15 : f32 to vector<16x16xf32>
    %19 = arith.minimumf %15, %18 : vector<16x16xf32>
    %20 = math.exp %19 : vector<16x16xf32>
    %cst_16 = arith.constant 1.000000e+00 : f32
    %21 = vector.broadcast %cst_16 : f32 to vector<16x16xf32>
    %22 = arith.subf %20, %21 : vector<16x16xf32>
    %23 = arith.select %17, %15, %22 : vector<16x16xi1>, vector<16x16xf32>
    %cst_17 = arith.constant dense<0.000000e+00> : vector<24x16xf32>
    %24 = tpu.matmul %1, %23, %cst_17 {dimension_numbers = #tpu.dot_dimension_numbers<[1], [0], [0], [1], [0, 0, 1, 1], [], []>} : vector<24x16xf32>, vector<16x16xf32>, vector<24x16xf32> -> vector<24x16xf32>
    %25 = vector.broadcast %2 : vector<24x1xf32> to vector<24x16xf32>
    %26 = arith.addf %24, %25 : vector<24x16xf32>
    %cst_18 = arith.constant 0.000000e+00 : f32
    %27 = vector.broadcast %cst_18 : f32 to vector<24x16xf32>
    %28 = arith.cmpf ogt, %26, %27 : vector<24x16xf32>
    %cst_19 = arith.constant 0.000000e+00 : f32
    %29 = vector.broadcast %cst_19 : f32 to vector<24x16xf32>
    %30 = arith.minimumf %26, %29 : vector<24x16xf32>
    %31 = math.exp %30 : vector<24x16xf32>
    %cst_20 = arith.constant 1.000000e+00 : f32
    %32 = vector.broadcast %cst_20 : f32 to vector<24x16xf32>
    %33 = arith.subf %31, %32 : vector<24x16xf32>
    %34 = arith.select %28, %26, %33 : vector<24x16xi1>, vector<24x16xf32>
    %35 = vector.extract_strided_slice %7 {offsets = [0, 0], sizes = [8, 1], strides = [1, 1]} : vector<8x4xf32> to vector<8x1xf32>
    %36 = vector.extract_strided_slice %7 {offsets = [0, 1], sizes = [8, 1], strides = [1, 1]} : vector<8x4xf32> to vector<8x1xf32>
    %37 = vector.extract_strided_slice %5 {offsets = [0, 0], sizes = [8, 1], strides = [1, 1]} : vector<8x16xf32> to vector<8x1xf32>
    %38 = tpu.concatenate %35, %36, %37 in 0 : vector<8x1xf32>, vector<8x1xf32>, vector<8x1xf32> -> vector<24x1xf32>
    %39 = vector.extract_strided_slice %5 {offsets = [0, 15], sizes = [8, 1], strides = [1, 1]} : vector<8x16xf32> to vector<8x1xf32>
    %40 = vector.extract_strided_slice %7 {offsets = [0, 2], sizes = [8, 1], strides = [1, 1]} : vector<8x4xf32> to vector<8x1xf32>
    %41 = vector.extract_strided_slice %7 {offsets = [0, 3], sizes = [8, 1], strides = [1, 1]} : vector<8x4xf32> to vector<8x1xf32>
    %42 = tpu.concatenate %39, %40, %41 in 0 : vector<8x1xf32>, vector<8x1xf32>, vector<8x1xf32> -> vector<24x1xf32>
    %43 = tpu.concatenate %38, %42 in 1 : vector<24x1xf32>, vector<24x1xf32> -> vector<24x2xf32>
    %cst_21 = arith.constant dense<0.000000e+00> : vector<16x2xf32>
    %44 = tpu.matmul %0, %43, %cst_21 {dimension_numbers = #tpu.dot_dimension_numbers<[1], [0], [0], [1], [0, 0, 1, 1], [], []>} : vector<16x24xf32>, vector<24x2xf32>, vector<16x2xf32> -> vector<16x2xf32>
    %cst_22 = arith.constant 0.000000e+00 : f32
    %45 = vector.broadcast %cst_22 : f32 to vector<16x2xf32>
    %46 = arith.cmpf ogt, %44, %45 : vector<16x2xf32>
    %cst_23 = arith.constant 0.000000e+00 : f32
    %47 = vector.broadcast %cst_23 : f32 to vector<16x2xf32>
    %48 = arith.minimumf %44, %47 : vector<16x2xf32>
    %49 = math.exp %48 : vector<16x2xf32>
    %cst_24 = arith.constant 1.000000e+00 : f32
    %50 = vector.broadcast %cst_24 : f32 to vector<16x2xf32>
    %51 = arith.subf %49, %50 : vector<16x2xf32>
    %52 = arith.select %46, %44, %51 : vector<16x2xi1>, vector<16x2xf32>
    %cst_25 = arith.constant dense<0.000000e+00> : vector<24x2xf32>
    %53 = tpu.matmul %1, %52, %cst_25 {dimension_numbers = #tpu.dot_dimension_numbers<[1], [0], [0], [1], [0, 0, 1, 1], [], []>} : vector<24x16xf32>, vector<16x2xf32>, vector<24x2xf32> -> vector<24x2xf32>
    %54 = vector.broadcast %2 : vector<24x1xf32> to vector<24x2xf32>
    %55 = arith.addf %53, %54 : vector<24x2xf32>
    %cst_26 = arith.constant 0.000000e+00 : f32
    %56 = vector.broadcast %cst_26 : f32 to vector<24x2xf32>
    %57 = arith.cmpf ogt, %55, %56 : vector<24x2xf32>
    %cst_27 = arith.constant 0.000000e+00 : f32
    %58 = vector.broadcast %cst_27 : f32 to vector<24x2xf32>
    %59 = arith.minimumf %55, %58 : vector<24x2xf32>
    %60 = math.exp %59 : vector<24x2xf32>
    %cst_28 = arith.constant 1.000000e+00 : f32
    %61 = vector.broadcast %cst_28 : f32 to vector<24x2xf32>
    %62 = arith.subf %60, %61 : vector<24x2xf32>
    %63 = arith.select %57, %55, %62 : vector<24x2xi1>, vector<24x2xf32>
    %64 = tpu.iota {dimensions = array<i32: 1>} : vector<1x2xi32>
    %c2_i32 = arith.constant 2 : i32
    %c0_i32 = arith.constant 0 : i32
    %65 = arith.cmpi eq, %c2_i32, %c0_i32 : i32
    %c1_i32 = arith.constant 1 : i32
    %66 = arith.select %65, %c1_i32, %c2_i32 : i32
    %67 = vector.broadcast %66 : i32 to vector<1x2xi32>
    %68 = arith.remsi %64, %67 : vector<1x2xi32>
    %c0_i32_29 = arith.constant 0 : i32
    %69 = vector.broadcast %c0_i32_29 : i32 to vector<1x2xi32>
    %70 = arith.cmpi ne, %68, %69 : vector<1x2xi32>
    %c0_i32_30 = arith.constant 0 : i32
    %71 = vector.broadcast %c0_i32_30 : i32 to vector<1x2xi32>
    %72 = arith.cmpi slt, %68, %71 : vector<1x2xi32>
    %c0_i32_31 = arith.constant 0 : i32
    %73 = arith.cmpi slt, %66, %c0_i32_31 : i32
    %74 = vector.broadcast %73 : i1 to vector<1x2xi1>
    %75 = vector.broadcast %74 : vector<1x2xi1> to vector<1x2xi1>
    %76 = arith.xori %72, %75 : vector<1x2xi1>
    %77 = arith.andi %76, %70 : vector<1x2xi1>
    %78 = vector.broadcast %66 : i32 to vector<1x2xi32>
    %79 = arith.addi %68, %78 : vector<1x2xi32>
    %80 = arith.select %77, %79, %68 : vector<1x2xi1>, vector<1x2xi32>
    %c0_i32_32 = arith.constant 0 : i32
    %81 = vector.broadcast %c0_i32_32 : i32 to vector<1x2xi32>
    %82 = arith.cmpi eq, %80, %81 : vector<1x2xi32>
    %c0_i32_33 = arith.constant 0 : i32
    %83 = arith.cmpi eq, %arg1, %c0_i32_33 : i32
    %84 = vector.broadcast %83 : i1 to vector<1x2xi1>
    %85 = arith.andi %84, %82 : vector<1x2xi1>
    %c0_i32_34 = arith.constant 0 : i32
    %86 = arith.cmpi eq, %arg1, %c0_i32_34 : i32
    %cst_35 = arith.constant dense<true> : vector<1x2xi1>
    %87 = arith.xori %82, %cst_35 : vector<1x2xi1>
    %88 = vector.broadcast %86 : i1 to vector<1x2xi1>
    %89 = arith.andi %88, %87 : vector<1x2xi1>
    %90 = arith.ori %85, %89 : vector<1x2xi1>
    %cst_36 = arith.constant 0.000000e+00 : f32
    %91 = vector.shape_cast %90 : vector<1x2xi1> to vector<1x2xi1>
    %92 = vector.broadcast %91 : vector<1x2xi1> to vector<24x2xi1>
    %93 = vector.broadcast %cst_36 : f32 to vector<24x2xf32>
    %94 = arith.select %92, %93, %63 : vector<24x2xi1>, vector<24x2xf32>
    %cst_37 = arith.constant dense<0.000000e+00> : vector<24x16xf32>
    %95 = tpu.matmul %3, %34, %cst_37 {dimension_numbers = #tpu.dot_dimension_numbers<[1], [0], [0], [1], [0, 0, 1, 1], [], []>} : vector<24x24xf32>, vector<24x16xf32>, vector<24x16xf32> -> vector<24x16xf32>
    %cst_38 = arith.constant dense<0.000000e+00> : vector<24x2xf32>
    %96 = tpu.matmul %3, %94, %cst_38 {dimension_numbers = #tpu.dot_dimension_numbers<[1], [0], [0], [1], [0, 0, 1, 1], [], []>} : vector<24x24xf32>, vector<24x2xf32>, vector<24x2xf32> -> vector<24x2xf32>
    %97 = vector.extract_strided_slice %96 {offsets = [0, 0], sizes = [8, 1], strides = [1, 1]} : vector<24x2xf32> to vector<8x1xf32>
    %98 = vector.extract_strided_slice %95 {offsets = [0, 0], sizes = [8, 15], strides = [1, 1]} : vector<24x16xf32> to vector<8x15xf32>
    %99 = tpu.concatenate %97, %98 in 1 : vector<8x1xf32>, vector<8x15xf32> -> vector<8x16xf32>
    %100 = vector.extract_strided_slice %95 {offsets = [16, 1], sizes = [8, 15], strides = [1, 1]} : vector<24x16xf32> to vector<8x15xf32>
    %101 = vector.extract_strided_slice %96 {offsets = [16, 1], sizes = [8, 1], strides = [1, 1]} : vector<24x2xf32> to vector<8x1xf32>
    %102 = tpu.concatenate %100, %101 in 1 : vector<8x15xf32>, vector<8x1xf32> -> vector<8x16xf32>
    %103 = vector.extract_strided_slice %95 {offsets = [8, 0], sizes = [8, 16], strides = [1, 1]} : vector<24x16xf32> to vector<8x16xf32>
    %104 = arith.addf %99, %103 : vector<8x16xf32>
    %105 = arith.addf %104, %102 : vector<8x16xf32>
    %cst_39 = arith.constant 0.000000e+00 : f32
    %106 = vector.broadcast %cst_39 : f32 to vector<8x16xf32>
    %107 = arith.cmpf ogt, %105, %106 : vector<8x16xf32>
    %cst_40 = arith.constant 0.000000e+00 : f32
    %108 = vector.broadcast %cst_40 : f32 to vector<8x16xf32>
    %109 = arith.minimumf %105, %108 : vector<8x16xf32>
    %110 = math.exp %109 : vector<8x16xf32>
    %cst_41 = arith.constant 1.000000e+00 : f32
    %111 = vector.broadcast %cst_41 : f32 to vector<8x16xf32>
    %112 = arith.subf %110, %111 : vector<8x16xf32>
    %113 = arith.select %107, %105, %112 : vector<8x16xi1>, vector<8x16xf32>
    %c0_42 = arith.constant 0 : index
    %c0_43 = arith.constant 0 : index
    %c0_44 = arith.constant 0 : index
    %114 = vector.load %arg2[%c0_42, %c0_43, %c0_44] : memref<1x8x16xf32, #tpu.memory_space<vmem>>, vector<1x8x16xf32>
    %115 = vector.shape_cast %114 : vector<1x8x16xf32> to vector<8x16xf32>
    %116 = arith.addf %113, %115 : vector<8x16xf32>
    %c0_45 = arith.constant 0 : index
    %c0_46 = arith.constant 0 : index
    %c0_47 = arith.constant 0 : index
    %117 = vector.load %arg8[%c0_45, %c0_46, %c0_47] : memref<1x8x16xf32, #tpu.memory_space<vmem>>, vector<1x8x16xf32>
    %118 = vector.shape_cast %117 : vector<1x8x16xf32> to vector<8x16xf32>
    %119 = vector.shape_cast %116 : vector<8x16xf32> to vector<1x8x16xf32>
    tpu.vector_store %arg8[%c0_45, %c0_46, %c0_47], %119 {strides = array<i32>} : memref<1x8x16xf32, #tpu.memory_space<vmem>>, vector<1x8x16xf32>,
    return
  }
  func.func @transform_0(%arg0: i32, %arg1: i32) -> (i32, i32, i32) {
    %c0_i32 = arith.constant 0 : i32
    %c0_i32_0 = arith.constant 0 : i32
    return %arg0, %c0_i32, %arg1 : i32, i32, i32
  }
  func.func @transform_1(%arg0: i32, %arg1: i32) -> (i32, i32, i32, i32) {
    %c0_i32 = arith.constant 0 : i32
    %c0_i32_0 = arith.constant 0 : i32
    %c0_i32_1 = arith.constant 0 : i32
    return %arg0, %arg1, %c0_i32, %c0_i32_0 : i32, i32, i32, i32
  }
  func.func @transform_2(%arg0: i32, %arg1: i32) -> (i32, i32) {
    %c0_i32 = arith.constant 0 : i32
    %c0_i32_0 = arith.constant 0 : i32
    %c0_i32_1 = arith.constant 0 : i32
    return %c0_i32, %c0_i32_0 : i32, i32
  }
  func.func @transform_3(%arg0: i32, %arg1: i32) -> (i32, i32) {
    %c0_i32 = arith.constant 0 : i32
    %c0_i32_0 = arith.constant 0 : i32
    %c0_i32_1 = arith.constant 0 : i32
    return %c0_i32, %c0_i32_0 : i32, i32
  }
  func.func @transform_4(%arg0: i32, %arg1: i32) -> (i32, i32) {
    %c0_i32 = arith.constant 0 : i32
    %c0_i32_0 = arith.constant 0 : i32
    %c0_i32_1 = arith.constant 0 : i32
    return %c0_i32, %c0_i32_0 : i32, i32
  }
  func.func @transform_5(%arg0: i32, %arg1: i32) -> (i32, i32) {
    %c0_i32 = arith.constant 0 : i32
    %c0_i32_0 = arith.constant 0 : i32
    %c0_i32_1 = arith.constant 0 : i32
    return %c0_i32, %c0_i32_0 : i32, i32
  }
  func.func @transform_6(%arg0: i32, %arg1: i32) -> (i32, i32, i32) {
    %c0_i32 = arith.constant 0 : i32
    %c0_i32_0 = arith.constant 0 : i32
    return %arg0, %c0_i32, %arg1 : i32, i32, i32
  }
}

</mosaic_0001>

<llo_original>
// kernel: tpu_custom_call.1
$region0: #{tpu_custom_call.1}
  #allocation0 [shape = 'u32[]', space=smem, size = 0x4, offset = 0x4, fixed_abs, tag = 'smem constant byte address 0x4 - core index']
  #allocation1 [shape = 'u32[144,128]{1,0:T(1,128)}', space=vmem, size = 0x12000, scoped, tag = 'internal scratch']
  %s0 = inlined_call_operand.vmem [shape: f32[2,8,16], index: 0, kind: input, shape index: {}]
  %s1 = inlined_call_operand.vmem [shape: f32[2,1,8,4], index: 1, kind: input, shape index: {}]
  %s2 = inlined_call_operand.vmem [shape: f32[16,24], index: 2, kind: input, shape index: {}]
  %s3 = inlined_call_operand.vmem [shape: f32[24,16], index: 3, kind: input, shape index: {}]
  %s4 = inlined_call_operand.vmem [shape: f32[24,1], index: 4, kind: input, shape index: {}]
  %s5 = inlined_call_operand.vmem [shape: f32[24,24], index: 5, kind: input, shape index: {}]
  %s6 = inlined_call_operand.hbm [shape: f32[2,8,16], index: 6, kind: output, shape index: {}]
  %s7 = sld [smem:[#allocation0]]
  $region57: #{tpu_custom_call.1} parent=0
    _
  %s9 = ssub.s32 1, %s7
  %s10 = scalar_select 0, %s9, %s7
  $region1: #{tpu_custom_call.1} parent=0
    #allocation2 [shape = 'u8[8192]{0}', space=vmem, size = 0x2000, scoped, tag = 'output window, operand 0']
    #allocation3 [shape = 's32[2]{0}', space=sflag, size = 0x8, scoped, tag = 'scoped memory for tpu_custom_call.1']
    %11 = vsyncpa [#allocation3], 0
    %s12 = scalar_lea.sflag [#allocation3], 1
    %13 = vsyncpa %s12, 0
    loop: start=0, step=1, limit=4
    $region2: #{tpu_custom_call.1} parent=1 // loop_pre_header
      _
    $region3: #{tpu_custom_call.1} parent=1 // loop_header
      %s15 = sphi 0, %s19
      %p16 = scmp.ge.s32.totalorder %s15, 4
      %s22 = sphi 0, %s34
      %s23 = sphi 0, %s30
      %s24 = sphi 0, %s22
      %s25 = sphi 0, %s23
      %s26 = sphi 0, %s24
      %s27 = sphi 0, %s25
      %s39 = sphi 0, %s41
      %s42 = sphi 0, %s39
      %s43 = sphi 0, %s42
      %s59 = sphi 0, %s43
      %s67 = sphi 0, %s69
      %s70 = sphi 0, %s67
      %s71 = sphi 0, %s70
      %s87 = sphi 0, %s71
      %s91 = sphi 0, %s91
      %s93 = sphi 0, %s91
      %s94 = sphi 0, %s93
      %s108 = sphi 0, %s94
      %s112 = sphi 0, %s112
      %s114 = sphi 0, %s112
      %s115 = sphi 0, %s114
      %s129 = sphi 0, %s115
      %s133 = sphi 0, %s133
      %s135 = sphi 0, %s133
      %s136 = sphi 0, %s135
      %s150 = sphi 0, %s136
      %s154 = sphi 0, %s154
      %s156 = sphi 0, %s154
      %s157 = sphi 0, %s156
      %s171 = sphi 0, %s157
      %s179 = sphi 0, %s181
      %s182 = sphi 0, %s179
      %s183 = sphi 0, %s182
      %s199 = sphi 0, %s183
    $region4: #{tpu_custom_call.1} parent=1 // loop_header_branch
      %18 = sbr.rel (%p16) target = $region8
    $region5: #{tpu_custom_call.1} parent=1 // loop_body
      %s20 = ssub.s32 %s15, 1
      %s21 = ssub.s32 %s15, 2
      %s28 = sadd.s32 1, %s23
      %p29 = scmp.ge.s32.totalorder %s28, 1
      %s30 = scalar_select %p29, 0, %s28
      %s31 = sadd.s32 1, %s22
      %s32 = scalar_select %p29, %s31, %s22
      %p33 = scmp.ge.s32.totalorder %s32, 2
      %s34 = scalar_select %p33, 0, %s32
      %s35 = ssub.s32 %s22, %s34
      %s36 = ssub.s32 %s23, %s30
      %s37 = sor.u32 %s35, %s36
      %p38 = scmp.eq.s32.totalorder %s37, 0
      %s40 = sadd.s32 %s39, 1
      %s41 = scalar_select %p38, %s39, %s40
      %p44 = pneg %p38
      %p45 = scmp.eq.s32.totalorder %s15, 1
      %p46 = por %p44, %p45
      %p47 = scmp.ne.s32.totalorder %s39, %s42
      %p48 = scmp.eq.s32.totalorder %s15, 0
      %p49 = por %p47, %p48
      %p50 = scmp.ne.s32.totalorder %s39, %s42
      %p51 = scmp.eq.s32.totalorder %s20, 1
      %p52 = por %p50, %p51
      %p53 = scmp.ne.s32.totalorder %s42, %s43
      %p54 = scmp.eq.s32.totalorder %s20, 0
      %p55 = por %p53, %p54
      %p56 = scmp.ne.s32.totalorder %s42, %s43
      %p57 = scmp.eq.s32.totalorder %s21, 1
      %p58 = por %p56, %p57
      %p60 = scmp.ne.s32.totalorder %s43, %s59
      %p61 = scmp.eq.s32.totalorder %s21, 0
      %p62 = por %p60, %p61
      %s63 = ssub.s32 %s22, %s34
      %s64 = ssub.s32 %s23, %s30
      %s65 = sor.u32 %s63, %s64
      %p66 = scmp.eq.s32.totalorder %s65, 0
      %s68 = sadd.s32 %s67, 1
      %s69 = scalar_select %p66, %s67, %s68
      %p72 = pneg %p66
      %p73 = scmp.eq.s32.totalorder %s15, 1
      %p74 = por %p72, %p73
      %p75 = scmp.ne.s32.totalorder %s67, %s70
      %p76 = scmp.eq.s32.totalorder %s15, 0
      %p77 = por %p75, %p76
      %p78 = scmp.ne.s32.totalorder %s67, %s70
      %p79 = scmp.eq.s32.totalorder %s20, 1
      %p80 = por %p78, %p79
      %p81 = scmp.ne.s32.totalorder %s70, %s71
      %p82 = scmp.eq.s32.totalorder %s20, 0
      %p83 = por %p81, %p82
      %p84 = scmp.ne.s32.totalorder %s70, %s71
      %p85 = scmp.eq.s32.totalorder %s21, 1
      %p86 = por %p84, %p85
      %p88 = scmp.ne.s32.totalorder %s71, %s87
      %p89 = scmp.eq.s32.totalorder %s21, 0
      %p90 = por %p88, %p89
      %s92 = sadd.s32 %s91, 1
      %p95 = scmp.eq.s32.totalorder %s15, 1
      %p96 = scmp.ne.s32.totalorder %s91, %s93
      %p97 = scmp.eq.s32.totalorder %s15, 0
      %p98 = por %p96, %p97
      %p99 = scmp.ne.s32.totalorder %s91, %s93
      %p100 = scmp.eq.s32.totalorder %s20, 1
      %p101 = por %p99, %p100
      %p102 = scmp.ne.s32.totalorder %s93, %s94
      %p103 = scmp.eq.s32.totalorder %s20, 0
      %p104 = por %p102, %p103
      %p105 = scmp.ne.s32.totalorder %s93, %s94
      %p106 = scmp.eq.s32.totalorder %s21, 1
      %p107 = por %p105, %p106
      %p109 = scmp.ne.s32.totalorder %s94, %s108
      %p110 = scmp.eq.s32.totalorder %s21, 0
      %p111 = por %p109, %p110
      %s113 = sadd.s32 %s112, 1
      %p116 = scmp.eq.s32.totalorder %s15, 1
      %p117 = scmp.ne.s32.totalorder %s112, %s114
      %p118 = scmp.eq.s32.totalorder %s15, 0
      %p119 = por %p117, %p118
      %p120 = scmp.ne.s32.totalorder %s112, %s114
      %p121 = scmp.eq.s32.totalorder %s20, 1
      %p122 = por %p120, %p121
      %p123 = scmp.ne.s32.totalorder %s114, %s115
      %p124 = scmp.eq.s32.totalorder %s20, 0
      %p125 = por %p123, %p124
      %p126 = scmp.ne.s32.totalorder %s114, %s115
      %p127 = scmp.eq.s32.totalorder %s21, 1
      %p128 = por %p126, %p127
      %p130 = scmp.ne.s32.totalorder %s115, %s129
      %p131 = scmp.eq.s32.totalorder %s21, 0
      %p132 = por %p130, %p131
      %s134 = sadd.s32 %s133, 1
      %p137 = scmp.eq.s32.totalorder %s15, 1
      %p138 = scmp.ne.s32.totalorder %s133, %s135
      %p139 = scmp.eq.s32.totalorder %s15, 0
      %p140 = por %p138, %p139
      %p141 = scmp.ne.s32.totalorder %s133, %s135
      %p142 = scmp.eq.s32.totalorder %s20, 1
      %p143 = por %p141, %p142
      %p144 = scmp.ne.s32.totalorder %s135, %s136
      %p145 = scmp.eq.s32.totalorder %s20, 0
      %p146 = por %p144, %p145
      %p147 = scmp.ne.s32.totalorder %s135, %s136
      %p148 = scmp.eq.s32.totalorder %s21, 1
      %p149 = por %p147, %p148
      %p151 = scmp.ne.s32.totalorder %s136, %s150
      %p152 = scmp.eq.s32.totalorder %s21, 0
      %p153 = por %p151, %p152
      %s155 = sadd.s32 %s154, 1
      %p158 = scmp.eq.s32.totalorder %s15, 1
      %p159 = scmp.ne.s32.totalorder %s154, %s156
      %p160 = scmp.eq.s32.totalorder %s15, 0
      %p161 = por %p159, %p160
      %p162 = scmp.ne.s32.totalorder %s154, %s156
      %p163 = scmp.eq.s32.totalorder %s20, 1
      %p164 = por %p162, %p163
      %p165 = scmp.ne.s32.totalorder %s156, %s157
      %p166 = scmp.eq.s32.totalorder %s20, 0
      %p167 = por %p165, %p166
      %p168 = scmp.ne.s32.totalorder %s156, %s157
      %p169 = scmp.eq.s32.totalorder %s21, 1
      %p170 = por %p168, %p169
      %p172 = scmp.ne.s32.totalorder %s157, %s171
      %p173 = scmp.eq.s32.totalorder %s21, 0
      %p174 = por %p172, %p173
      %s175 = ssub.s32 %s22, %s34
      %s176 = ssub.s32 %s23, %s30
      %s177 = sor.u32 %s175, %s176
      %p178 = scmp.eq.s32.totalorder %s177, 0
      %s180 = sadd.s32 %s179, 1
      %s181 = scalar_select %p178, %s179, %s180
      %p184 = pneg %p178
      %p185 = scmp.eq.s32.totalorder %s15, 1
      %p186 = por %p184, %p185
      %p187 = scmp.ne.s32.totalorder %s179, %s182
      %p188 = scmp.eq.s32.totalorder %s15, 0
      %p189 = por %p187, %p188
      %p190 = scmp.ne.s32.totalorder %s179, %s182
      %p191 = scmp.eq.s32.totalorder %s20, 1
      %p192 = por %p190, %p191
      %p193 = scmp.ne.s32.totalorder %s182, %s183
      %p194 = scmp.eq.s32.totalorder %s20, 0
      %p195 = por %p193, %p194
      %p196 = scmp.ne.s32.totalorder %s182, %s183
      %p197 = scmp.eq.s32.totalorder %s21, 1
      %p198 = por %p196, %p197
      %p200 = scmp.ne.s32.totalorder %s183, %s199
      %p201 = scmp.eq.s32.totalorder %s21, 0
      %p202 = por %p200, %p201
      %p203 = scmp.le.s32.totalorder 1, %s15
      %p204 = scmp.lt.s32.totalorder %s15, 3
      %p205 = pnand %p203, %p204
      %p206 = pneg %p205
      // Predicated region
      $region9: #{tpu_custom_call.1} parent=5 // pred_check
        _
      $region10: #{tpu_custom_call.1} parent=5 // pred_check_branch
        %208 = sbr.rel (%p205) target = $region12
      $region11: #{tpu_custom_call.1} parent=5 // pred_region
        %s209 = ssub.s32 %s15, 1
        // Predicated region
        $region13: #{tpu_custom_call.1} parent=11 // pred_check
          %p210 = pneg %p104
        $region14: #{tpu_custom_call.1} parent=11 // pred_check_branch
          %212 = sbr.rel (%p210) target = $region16
        $region15: #{tpu_custom_call.1} parent=11 // pred_region
          _
        $region16: #{tpu_custom_call.1} parent=11 // pred_fallthru
          _
        // Predicated region
        $region17: #{tpu_custom_call.1} parent=11 // pred_check
          %p213 = pneg %p125
        $region18: #{tpu_custom_call.1} parent=11 // pred_check_branch
          %215 = sbr.rel (%p213) target = $region20
        $region19: #{tpu_custom_call.1} parent=11 // pred_region
          _
        $region20: #{tpu_custom_call.1} parent=11 // pred_fallthru
          _
        // Predicated region
        $region21: #{tpu_custom_call.1} parent=11 // pred_check
          %p216 = pneg %p146
        $region22: #{tpu_custom_call.1} parent=11 // pred_check_branch
          %218 = sbr.rel (%p216) target = $region24
        $region23: #{tpu_custom_call.1} parent=11 // pred_region
          _
        $region24: #{tpu_custom_call.1} parent=11 // pred_fallthru
          _
        // Predicated region
        $region25: #{tpu_custom_call.1} parent=11 // pred_check
          %p219 = pneg %p167
        $region26: #{tpu_custom_call.1} parent=11 // pred_check_branch
          %221 = sbr.rel (%p219) target = $region28
        $region27: #{tpu_custom_call.1} parent=11 // pred_region
          _
        $region28: #{tpu_custom_call.1} parent=11 // pred_fallthru
          _
      $region12: #{tpu_custom_call.1} parent=5 // pred_fallthru
        _
      %p222 = scmp.lt.s32.totalorder %s15, 2
      // Predicated region
      $region29: #{tpu_custom_call.1} parent=5 // pred_check
        %p223 = pneg %p222
      $region30: #{tpu_custom_call.1} parent=5 // pred_check_branch
        %225 = sbr.rel (%p223) target = $region32
      $region31: #{tpu_custom_call.1} parent=5 // pred_region
        // Predicated region
        $region33: #{tpu_custom_call.1} parent=31 // pred_check
          %p226 = pneg %p49
        $region34: #{tpu_custom_call.1} parent=31 // pred_check_branch
          %228 = sbr.rel (%p226) target = $region36
        $region35: #{tpu_custom_call.1} parent=31 // pred_region
          %p229 = scmp.lt.s32.totalorder %s22, 1
          %s230 = scalar_select %p229, %s22, 1
          %p231 = scmp.lt.s32.totalorder %s23, 0
          %s232 = scalar_select %p231, %s23, 0
          %s233 = sadd.s32 %s232, %s230
          %s234 = smul.addr %s233, 8
          %s235 = scalar_lea.vmem %s0, %s234
        $region36: #{tpu_custom_call.1} parent=31 // pred_fallthru
          _
        // Predicated region
        $region37: #{tpu_custom_call.1} parent=31 // pred_check
          %p236 = pneg %p77
        $region38: #{tpu_custom_call.1} parent=31 // pred_check_branch
          %238 = sbr.rel (%p236) target = $region40
        $region39: #{tpu_custom_call.1} parent=31 // pred_region
          %p239 = scmp.lt.s32.totalorder %s22, 1
          %s240 = scalar_select %p239, %s22, 1
          %p241 = scmp.lt.s32.totalorder %s23, 0
          %s242 = scalar_select %p241, %s23, 0
          %s243 = sadd.s32 %s242, %s240
          %s244 = smul.addr %s243, 8
          %s245 = scalar_lea.vmem %s1, %s244
        $region40: #{tpu_custom_call.1} parent=31 // pred_fallthru
          _
      $region32: #{tpu_custom_call.1} parent=5 // pred_fallthru
        _
      %p246 = scmp.le.s32.totalorder 1, %s15
      %p247 = scmp.lt.s32.totalorder %s15, 3
      %p248 = pnand %p246, %p247
      %p249 = pneg %p248
      // Predicated region
      $region41: #{tpu_custom_call.1} parent=5 // pred_check
        _
      $region42: #{tpu_custom_call.1} parent=5 // pred_check_branch
        %251 = sbr.rel (%p248) target = $region44
      $region43: #{tpu_custom_call.1} parent=5 // pred_region
        %s252 = ssub.s32 %s15, 1
        %p253 = scmp.lt.s32.totalorder %s24, 1
        %s254 = scalar_select %p253, %s24, 1
        %p255 = scmp.lt.s32.totalorder %s25, 0
        %s256 = scalar_select %p255, %s25, 0
        %s257 = sadd.s32 %s256, %s254
        %s258 = smul.addr %s257, 8
        %s259 = scalar_lea.vmem %s0, %s258
        %p260 = pneg %p55
        %p261 = pneg %p52
        %p262 = scmp.lt.s32.totalorder %s24, 1
        %s263 = scalar_select %p262, %s24, 1
        %p264 = scmp.lt.s32.totalorder %s25, 0
        %s265 = scalar_select %p264, %s25, 0
        %s266 = sadd.s32 %s265, %s263
        %s267 = smul.addr %s266, 8
        %s268 = scalar_lea.vmem %s1, %s267
        %p269 = pneg %p83
        %p270 = pneg %p80
        %p271 = pneg %p104
        %p272 = pneg %p101
        %p273 = pneg %p125
        %p274 = pneg %p122
        %p275 = pneg %p146
        %p276 = pneg %p143
        %p277 = pneg %p167
        %p278 = pneg %p164
        %p279 = pneg %p195
        %p280 = pneg %p192
        %s281 = sand.u32 %s182, 1
        %s282 = scalar_lea.sflag [#allocation3], %s281
        %s283 = sand.u32 %s182, 1
        %s284 = smul.addr %s283, 8
        %s285 = scalar_lea.vmem [#allocation2], %s284
        %p286 = scmp.lt.s32.totalorder %s24, 1
        %s287 = scalar_select %p286, %s24, 1
        %p288 = scmp.lt.s32.totalorder %s25, 0
        %s289 = scalar_select %p288, %s25, 0
        %s290 = sadd.s32 %s289, %s287
        %s291 = smul.addr %s290, 8
        %s292 = scalar_lea.vmem %s0, %s291
        %p293 = scmp.lt.s32.totalorder %s24, 1
        %s294 = scalar_select %p293, %s24, 1
        %p295 = scmp.lt.s32.totalorder %s25, 0
        %s296 = scalar_select %p295, %s25, 0
        %s297 = sadd.s32 %s296, %s294
        %s298 = smul.addr %s297, 8
        %s299 = scalar_lea.vmem %s1, %s298
        %v300 = vld [vmem:[%s2] sm:$0xff]
        %v301 = vld [vmem:[%s2 + $0x8] sm:$0xff]
        %v302 = vld [vmem:[%s3] sm:$0xff]
        %v303 = vld [vmem:[%s3 + $0x8] sm:$0xff]
        %v304 = vld [vmem:[%s3 + $0x10] sm:$0xff]
        %v305 = vld [vmem:[%s4] sm:$0xff]
        %v306 = vld [vmem:[%s4 + $0x8] sm:$0xff]
        %v307 = vld [vmem:[%s4 + $0x10] sm:$0xff]
        %v308 = vld [vmem:[%s5] sm:$0xff]
        %v309 = vld [vmem:[%s5 + $0x8] sm:$0xff]
        %v310 = vld [vmem:[%s5 + $0x10] sm:$0xff]
        %v311 = vld [vmem:[%s292] sm:$0xff]
        %v312 = vld [vmem:[%s299] sm:$0xff]
        %314 = vrot.lane.b32.xlu0 %v312, 127
        %v315 = vpop.permute.xlu0 %314
        %318 = vrot.lane.b32.xlu0 %v311, 1
        %v319 = vpop.permute.xlu0 %318
        %vm321 = vcmask 7168
        %v322 = vsel %vm321, %v315, %v319
        %323 = vrot.lane.b32.xlu0 %v311, 127
        %v324 = vpop.permute.xlu0 %323
        %326 = vrot.lane.b32.xlu0 %v312, 13
        %v327 = vpop.permute.xlu0 %326
        %vm329 = vcmask 121856
        %v330 = vsel %vm329, %v324, %v327
        %vm331 = vcmask 195584
        %v333 = vsel %vm331, %v300, 0
        %v336 = vsel %vm331, %v301, 0
        %338 = vmatprep.subr.mxu0 0.0
        %339 = vmatpush1.msra.mxu0 %v322
        %340 = vmatprep.subr.mxu0 0.0
        %341 = vmatpush1.msra.mxu0 %v311
        %342 = vmatprep.subr.mxu0 0.0
        %343 = vmatpush1.msra.mxu0 %v330
        %344 = vmatprep.subr.mxu0 0.0
        %345 = vmatpush1.msra.mxu0 0.0
        %346 = vmatprep.subr.mxu0 0.0
        %347 = vmatpush1.msra.mxu0 0.0
        %348 = vmatprep.subr.mxu0 0.0
        %349 = vmatpush1.msra.mxu0 0.0
        %350 = vmatprep.subr.mxu0 0.0
        %351 = vmatpush1.msra.mxu0 0.0
        %352 = vmatprep.subr.mxu0 0.0
        %353 = vmatpush1.msra.mxu0 0.0
        %354 = vmatprep.subr.mxu0 0.0
        %355 = vmatpush1.msra.mxu0 0.0
        %356 = vmatprep.subr.mxu0 0.0
        %357 = vmatpush1.msra.mxu0 0.0
        %358 = vmatprep.subr.mxu0 0.0
        %359 = vmatpush1.msra.mxu0 0.0
        %360 = vmatprep.subr.mxu0 0.0
        %361 = vmatpush1.msra.mxu0 0.0
        %362 = vmatprep.subr.mxu0 0.0
        %363 = vmatpush1.msra.mxu0 0.0
        %364 = vmatprep.subr.mxu0 0.0
        %365 = vmatpush1.msra.mxu0 0.0
        %366 = vmatprep.subr.mxu0 0.0
        %367 = vmatpush1.msra.mxu0 0.0
        %368 = vmatprep.subr.mxu0 0.0
        %369 = vmatpush1.msra.mxu0 0.0
        %370 = vmatprep.subr.mxu0 0.0
        %371 = vmatpush1.msra.mxu0 0.0
        %372 = vmatprep.subr.mxu0 0.0
        %373 = vmatpush1.msra.mxu0 0.0
        %374 = vmatprep.subr.mxu0 0.0
        %375 = vmatpush1.msra.mxu0 0.0
        %376 = vmatprep.subr.mxu0 0.0
        %377 = vmatpush1.msra.mxu0 0.0
        %378 = vmatprep.subr.mxu0 0.0
        %379 = vmatpush1.msra.mxu0 0.0
        %380 = vmatprep.subr.mxu0 0.0
        %381 = vmatpush1.msra.mxu0 0.0
        %382 = vmatprep.subr.mxu0 0.0
        %383 = vmatpush1.msra.mxu0 0.0
        %384 = vmatprep.subr.mxu0 0.0
        %385 = vmatpush1.msra.mxu0 0.0
        %386 = vmatprep.subr.mxu0 0.0
        %387 = vmatpush1.msra.mxu0 0.0
        %388 = vmatprep.subr.mxu0 0.0
        %389 = vmatpush1.msra.mxu0 0.0
        %390 = vmatprep.subr.mxu0 0.0
        %391 = vmatpush1.msra.mxu0 0.0
        %392 = vmatprep.subr.mxu0 0.0
        %393 = vmatpush1.msra.mxu0 0.0
        %394 = vmatprep.subr.mxu0 0.0
        %395 = vmatpush1.msra.mxu0 0.0
        %396 = vmatprep.subr.mxu0 0.0
        %397 = vmatpush1.msra.mxu0 0.0
        %398 = vmatprep.subr.mxu0 0.0
        %399 = vmatpush1.msra.mxu0 0.0
        %400 = vmatprep.subr.mxu0 0.0
        %401 = vmatpush1.msra.mxu0 0.0
        %402 = vmatprep.mubr.f32.mxu0 0.0
        %403 = vmatmul.mubr.f32.gmra.mrb[0].mxu0 %v333
        %v404 = vpop.f32.mrb[0].mxu0
        %v405 = vadd.f32 0.0, %v404
        %v406 = vpop.f32.mrb[0].mxu0
        %407 = vmatprep.mubr.f32.mxu0 0.0
        %408 = vmatmul.mubr.f32.gmra.mrb[0].mxu0 %v336
        %v409 = vpop.f32.mrb[0].mxu0
        %v410 = vadd.f32 0.0, %v409
        %v411 = vpop.f32.mrb[0].mxu0
        %412 = vdwg.mxu0
        %vm413 = vcmp.gt.f32.partialorder %v405, 0.0
        %vm414 = vcmp.gt.f32.partialorder %v410, 0.0
        %v415 = vmin.f32 %v405, 0.0
        %v416 = vmin.f32 %v410, 0.0
        %v417 = vmul.f32 %v415, 1.442695
        %v418 = vpow.pop %v417
        %v419 = vmul.f32 %v416, 1.442695
        %v420 = vpow.pop %v419
        %v421 = vsub.f32 %v418, 1.0
        %v422 = vsub.f32 %v420, 1.0
        %v423 = vsel %vm413, %v405, %v421
        %v424 = vsel %vm414, %v410, %v422
        %426 = vset.pattern.permute.xlu0 0
        %427 = vperm.xlu0 %426, %v305
        %v428 = vpop.permute.xlu0 %427
        %431 = vset.pattern.permute.xlu0 0
        %432 = vperm.xlu0 %431, %v306
        %v433 = vpop.permute.xlu0 %432
        %436 = vset.pattern.permute.xlu0 0
        %437 = vperm.xlu0 %436, %v307
        %v438 = vpop.permute.xlu0 %437
        %vm440 = vcmask 130048
        %v442 = vsel %vm440, %v302, 0
        %v445 = vsel %vm440, %v303, 0
        %v448 = vsel %vm440, %v304, 0
        %450 = vmatprep.subr.mxu0 0.0
        %451 = vmatpush1.msra.mxu0 %v423
        %452 = vmatprep.subr.mxu0 0.0
        %453 = vmatpush1.msra.mxu0 %v424
        %454 = vmatprep.subr.mxu0 0.0
        %455 = vmatpush1.msra.mxu0 0.0
        %456 = vmatprep.subr.mxu0 0.0
        %457 = vmatpush1.msra.mxu0 0.0
        %458 = vmatprep.subr.mxu0 0.0
        %459 = vmatpush1.msra.mxu0 0.0
        %460 = vmatprep.subr.mxu0 0.0
        %461 = vmatpush1.msra.mxu0 0.0
        %462 = vmatprep.subr.mxu0 0.0
        %463 = vmatpush1.msra.mxu0 0.0
        %464 = vmatprep.subr.mxu0 0.0
        %465 = vmatpush1.msra.mxu0 0.0
        %466 = vmatprep.subr.mxu0 0.0
        %467 = vmatpush1.msra.mxu0 0.0
        %468 = vmatprep.subr.mxu0 0.0
        %469 = vmatpush1.msra.mxu0 0.0
        %470 = vmatprep.subr.mxu0 0.0
        %471 = vmatpush1.msra.mxu0 0.0
        %472 = vmatprep.subr.mxu0 0.0
        %473 = vmatpush1.msra.mxu0 0.0
        %474 = vmatprep.subr.mxu0 0.0
        %475 = vmatpush1.msra.mxu0 0.0
        %476 = vmatprep.subr.mxu0 0.0
        %477 = vmatpush1.msra.mxu0 0.0
        %478 = vmatprep.subr.mxu0 0.0
        %479 = vmatpush1.msra.mxu0 0.0
        %480 = vmatprep.subr.mxu0 0.0
        %481 = vmatpush1.msra.mxu0 0.0
        %482 = vmatprep.subr.mxu0 0.0
        %483 = vmatpush1.msra.mxu0 0.0
        %484 = vmatprep.subr.mxu0 0.0
        %485 = vmatpush1.msra.mxu0 0.0
        %486 = vmatprep.subr.mxu0 0.0
        %487 = vmatpush1.msra.mxu0 0.0
        %488 = vmatprep.subr.mxu0 0.0
        %489 = vmatpush1.msra.mxu0 0.0
        %490 = vmatprep.subr.mxu0 0.0
        %491 = vmatpush1.msra.mxu0 0.0
        %492 = vmatprep.subr.mxu0 0.0
        %493 = vmatpush1.msra.mxu0 0.0
        %494 = vmatprep.subr.mxu0 0.0
        %495 = vmatpush1.msra.mxu0 0.0
        %496 = vmatprep.subr.mxu0 0.0
        %497 = vmatpush1.msra.mxu0 0.0
        %498 = vmatprep.subr.mxu0 0.0
        %499 = vmatpush1.msra.mxu0 0.0
        %500 = vmatprep.subr.mxu0 0.0
        %501 = vmatpush1.msra.mxu0 0.0
        %502 = vmatprep.subr.mxu0 0.0
        %503 = vmatpush1.msra.mxu0 0.0
        %504 = vmatprep.subr.mxu0 0.0
        %505 = vmatpush1.msra.mxu0 0.0
        %506 = vmatprep.subr.mxu0 0.0
        %507 = vmatpush1.msra.mxu0 0.0
        %508 = vmatprep.subr.mxu0 0.0
        %509 = vmatpush1.msra.mxu0 0.0
        %510 = vmatprep.subr.mxu0 0.0
        %511 = vmatpush1.msra.mxu0 0.0
        %512 = vmatprep.subr.mxu0 0.0
        %513 = vmatpush1.msra.mxu0 0.0
        %514 = vmatprep.mubr.f32.mxu0 0.0
        %515 = vmatmul.mubr.f32.gmra.mrb[0].mxu0 %v442
        %v516 = vpop.f32.mrb[0].mxu0
        %v517 = vadd.f32 %v428, %v516
        %v518 = vpop.f32.mrb[0].mxu0
        %519 = vmatprep.mubr.f32.mxu0 0.0
        %520 = vmatmul.mubr.f32.gmra.mrb[0].mxu0 %v445
        %v521 = vpop.f32.mrb[0].mxu0
        %v522 = vadd.f32 %v433, %v521
        %v523 = vpop.f32.mrb[0].mxu0
        %524 = vmatprep.mubr.f32.mxu0 0.0
        %525 = vmatmul.mubr.f32.gmra.mrb[0].mxu0 %v448
        %v526 = vpop.f32.mrb[0].mxu0
        %v527 = vadd.f32 %v438, %v526
        %v528 = vpop.f32.mrb[0].mxu0
        %529 = vdwg.mxu0
        %vm530 = vcmp.gt.f32.partialorder %v517, 0.0
        %vm531 = vcmp.gt.f32.partialorder %v522, 0.0
        %vm532 = vcmp.gt.f32.partialorder %v527, 0.0
        %v533 = vmin.f32 %v517, 0.0
        %v534 = vmin.f32 %v522, 0.0
        %v535 = vmin.f32 %v527, 0.0
        %v536 = vmul.f32 %v533, 1.442695
        %v537 = vpow.pop %v536
        %v538 = vmul.f32 %v534, 1.442695
        %v539 = vpow.pop %v538
        %v540 = vmul.f32 %v535, 1.442695
        %v541 = vpow.pop %v540
        %v542 = vsub.f32 %v537, 1.0
        %v543 = vsub.f32 %v539, 1.0
        %v544 = vsub.f32 %v541, 1.0
        %v545 = vsel %vm530, %v517, %v542
        %v546 = vsel %vm531, %v522, %v543
        %v547 = vsel %vm532, %v527, %v544
        %548 = vrot.lane.b32.xlu0 %v312, 12
        %v549 = vpop.permute.xlu0 %548
        %550 = vrot.lane.b32.xlu0 %v311, 114
        %v551 = vpop.permute.xlu0 %550
        %552 = vrot.lane.b32.xlu0 %v327, 114
        %v553 = vpop.permute.xlu0 %552
        %554 = vrot.lane.b32.xlu0 %v549, 114
        %v555 = vpop.permute.xlu0 %554
        %v559 = vsel %vm321, %v312, %v551
        %v560 = vsel %vm321, %v315, %v553
        %v561 = vsel %vm321, %v311, %v555
        %562 = vmatprep.subr.mxu0 0.0
        %563 = vmatpush1.msra.mxu0 %v559
        %564 = vmatprep.subr.mxu0 0.0
        %565 = vmatpush1.msra.mxu0 %v560
        %566 = vmatprep.subr.mxu0 0.0
        %567 = vmatpush1.msra.mxu0 %v561
        %568 = vmatprep.subr.mxu0 0.0
        %569 = vmatpush1.msra.mxu0 0.0
        %570 = vmatprep.subr.mxu0 0.0
        %571 = vmatpush1.msra.mxu0 0.0
        %572 = vmatprep.subr.mxu0 0.0
        %573 = vmatpush1.msra.mxu0 0.0
        %574 = vmatprep.subr.mxu0 0.0
        %575 = vmatpush1.msra.mxu0 0.0
        %576 = vmatprep.subr.mxu0 0.0
        %577 = vmatpush1.msra.mxu0 0.0
        %578 = vmatprep.subr.mxu0 0.0
        %579 = vmatpush1.msra.mxu0 0.0
        %580 = vmatprep.subr.mxu0 0.0
        %581 = vmatpush1.msra.mxu0 0.0
        %582 = vmatprep.subr.mxu0 0.0
        %583 = vmatpush1.msra.mxu0 0.0
        %584 = vmatprep.subr.mxu0 0.0
        %585 = vmatpush1.msra.mxu0 0.0
        %586 = vmatprep.subr.mxu0 0.0
        %587 = vmatpush1.msra.mxu0 0.0
        %588 = vmatprep.subr.mxu0 0.0
        %589 = vmatpush1.msra.mxu0 0.0
        %590 = vmatprep.subr.mxu0 0.0
        %591 = vmatpush1.msra.mxu0 0.0
        %592 = vmatprep.subr.mxu0 0.0
        %593 = vmatpush1.msra.mxu0 0.0
        %594 = vmatprep.subr.mxu0 0.0
        %595 = vmatpush1.msra.mxu0 0.0
        %596 = vmatprep.subr.mxu0 0.0
        %597 = vmatpush1.msra.mxu0 0.0
        %598 = vmatprep.subr.mxu0 0.0
        %599 = vmatpush1.msra.mxu0 0.0
        %600 = vmatprep.subr.mxu0 0.0
        %601 = vmatpush1.msra.mxu0 0.0
        %602 = vmatprep.subr.mxu0 0.0
        %603 = vmatpush1.msra.mxu0 0.0
        %604 = vmatprep.subr.mxu0 0.0
        %605 = vmatpush1.msra.mxu0 0.0
        %606 = vmatprep.subr.mxu0 0.0
        %607 = vmatpush1.msra.mxu0 0.0
        %608 = vmatprep.subr.mxu0 0.0
        %609 = vmatpush1.msra.mxu0 0.0
        %610 = vmatprep.subr.mxu0 0.0
        %611 = vmatpush1.msra.mxu0 0.0
        %612 = vmatprep.subr.mxu0 0.0
        %613 = vmatpush1.msra.mxu0 0.0
        %614 = vmatprep.subr.mxu0 0.0
        %615 = vmatpush1.msra.mxu0 0.0
        %616 = vmatprep.subr.mxu0 0.0
        %617 = vmatpush1.msra.mxu0 0.0
        %618 = vmatprep.subr.mxu0 0.0
        %619 = vmatpush1.msra.mxu0 0.0
        %620 = vmatprep.subr.mxu0 0.0
        %621 = vmatpush1.msra.mxu0 0.0
        %622 = vmatprep.subr.mxu0 0.0
        %623 = vmatpush1.msra.mxu0 0.0
        %624 = vmatprep.subr.mxu0 0.0
        %625 = vmatpush1.msra.mxu0 0.0
        %626 = vmatprep.mubr.f32.mxu0 0.0
        %627 = vmatmul.mubr.f32.gmra.mrb[0].mxu0 %v333
        %v628 = vpop.f32.mrb[0].mxu0
        %v629 = vadd.f32 0.0, %v628
        %v630 = vpop.f32.mrb[0].mxu0
        %631 = vmatprep.mubr.f32.mxu0 0.0
        %632 = vmatmul.mubr.f32.gmra.mrb[0].mxu0 %v336
        %v633 = vpop.f32.mrb[0].mxu0
        %v634 = vadd.f32 0.0, %v633
        %v635 = vpop.f32.mrb[0].mxu0
        %636 = vdwg.mxu0
        %vm637 = vcmp.gt.f32.partialorder %v629, 0.0
        %vm638 = vcmp.gt.f32.partialorder %v634, 0.0
        %v639 = vmin.f32 %v629, 0.0
        %v640 = vmin.f32 %v634, 0.0
        %v641 = vmul.f32 %v639, 1.442695
        %v642 = vpow.pop %v641
        %v643 = vmul.f32 %v640, 1.442695
        %v644 = vpow.pop %v643
        %v645 = vsub.f32 %v642, 1.0
        %v646 = vsub.f32 %v644, 1.0
        %v647 = vsel %vm637, %v629, %v645
        %v648 = vsel %vm638, %v634, %v646
        %649 = vmatprep.subr.mxu0 0.0
        %650 = vmatpush1.msra.mxu0 %v647
        %651 = vmatprep.subr.mxu0 0.0
        %652 = vmatpush1.msra.mxu0 %v648
        %653 = vmatprep.subr.mxu0 0.0
        %654 = vmatpush1.msra.mxu0 0.0
        %655 = vmatprep.subr.mxu0 0.0
        %656 = vmatpush1.msra.mxu0 0.0
        %657 = vmatprep.subr.mxu0 0.0
        %658 = vmatpush1.msra.mxu0 0.0
        %659 = vmatprep.subr.mxu0 0.0
        %660 = vmatpush1.msra.mxu0 0.0
        %661 = vmatprep.subr.mxu0 0.0
        %662 = vmatpush1.msra.mxu0 0.0
        %663 = vmatprep.subr.mxu0 0.0
        %664 = vmatpush1.msra.mxu0 0.0
        %665 = vmatprep.subr.mxu0 0.0
        %666 = vmatpush1.msra.mxu0 0.0
        %667 = vmatprep.subr.mxu0 0.0
        %668 = vmatpush1.msra.mxu0 0.0
        %669 = vmatprep.subr.mxu0 0.0
        %670 = vmatpush1.msra.mxu0 0.0
        %671 = vmatprep.subr.mxu0 0.0
        %672 = vmatpush1.msra.mxu0 0.0
        %673 = vmatprep.subr.mxu0 0.0
        %674 = vmatpush1.msra.mxu0 0.0
        %675 = vmatprep.subr.mxu0 0.0
        %676 = vmatpush1.msra.mxu0 0.0
        %677 = vmatprep.subr.mxu0 0.0
        %678 = vmatpush1.msra.mxu0 0.0
        %679 = vmatprep.subr.mxu0 0.0
        %680 = vmatpush1.msra.mxu0 0.0
        %681 = vmatprep.subr.mxu0 0.0
        %682 = vmatpush1.msra.mxu0 0.0
        %683 = vmatprep.subr.mxu0 0.0
        %684 = vmatpush1.msra.mxu0 0.0
        %685 = vmatprep.subr.mxu0 0.0
        %686 = vmatpush1.msra.mxu0 0.0
        %687 = vmatprep.subr.mxu0 0.0
        %688 = vmatpush1.msra.mxu0 0.0
        %689 = vmatprep.subr.mxu0 0.0
        %690 = vmatpush1.msra.mxu0 0.0
        %691 = vmatprep.subr.mxu0 0.0
        %692 = vmatpush1.msra.mxu0 0.0
        %693 = vmatprep.subr.mxu0 0.0
        %694 = vmatpush1.msra.mxu0 0.0
        %695 = vmatprep.subr.mxu0 0.0
        %696 = vmatpush1.msra.mxu0 0.0
        %697 = vmatprep.subr.mxu0 0.0
        %698 = vmatpush1.msra.mxu0 0.0
        %699 = vmatprep.subr.mxu0 0.0
        %700 = vmatpush1.msra.mxu0 0.0
        %701 = vmatprep.subr.mxu0 0.0
        %702 = vmatpush1.msra.mxu0 0.0
        %703 = vmatprep.subr.mxu0 0.0
        %704 = vmatpush1.msra.mxu0 0.0
        %705 = vmatprep.subr.mxu0 0.0
        %706 = vmatpush1.msra.mxu0 0.0
        %707 = vmatprep.subr.mxu0 0.0
        %708 = vmatpush1.msra.mxu0 0.0
        %709 = vmatprep.subr.mxu0 0.0
        %710 = vmatpush1.msra.mxu0 0.0
        %711 = vmatprep.subr.mxu0 0.0
        %712 = vmatpush1.msra.mxu0 0.0
        %713 = vmatprep.mubr.f32.mxu0 0.0
        %714 = vmatmul.mubr.f32.gmra.mrb[0].mxu0 %v442
        %v715 = vpop.f32.mrb[0].mxu0
        %v716 = vadd.f32 %v428, %v715
        %v717 = vpop.f32.mrb[0].mxu0
        %718 = vmatprep.mubr.f32.mxu0 0.0
        %719 = vmatmul.mubr.f32.gmra.mrb[0].mxu0 %v445
        %v720 = vpop.f32.mrb[0].mxu0
        %v721 = vadd.f32 %v433, %v720
        %v722 = vpop.f32.mrb[0].mxu0
        %723 = vmatprep.mubr.f32.mxu0 0.0
        %724 = vmatmul.mubr.f32.gmra.mrb[0].mxu0 %v448
        %v725 = vpop.f32.mrb[0].mxu0
        %v726 = vadd.f32 %v438, %v725
        %v727 = vpop.f32.mrb[0].mxu0
        %728 = vdwg.mxu0
        %vm729 = vcmp.gt.f32.partialorder %v716, 0.0
        %vm730 = vcmp.gt.f32.partialorder %v721, 0.0
        %vm731 = vcmp.gt.f32.partialorder %v726, 0.0
        %v732 = vmin.f32 %v716, 0.0
        %v733 = vmin.f32 %v721, 0.0
        %v734 = vmin.f32 %v726, 0.0
        %v735 = vmul.f32 %v732, 1.442695
        %v736 = vpow.pop %v735
        %v737 = vmul.f32 %v733, 1.442695
        %v738 = vpow.pop %v737
        %v739 = vmul.f32 %v734, 1.442695
        %v740 = vpow.pop %v739
        %v741 = vsub.f32 %v736, 1.0
        %v742 = vsub.f32 %v738, 1.0
        %v743 = vsub.f32 %v740, 1.0
        %v744 = vsel %vm729, %v716, %v741
        %v745 = vsel %vm730, %v721, %v742
        %v746 = vsel %vm731, %v726, %v743
        %v747 = vlaneseq
        %v748 = vand.u32 %v747, 127
        %vm749 = vcmp.lt.s32.totalorder %v748, 0
        %v750 = vsub.s32 0, %v748
        %v751 = vsel %vm749, %v750, %v748
        %v752 = vshrl.u32 %v751, 1
        %v753 = vand.u32 %v751, 1
        %v754 = vsub.s32 0, %v753
        %v755 = vsel %vm749, %v754, %v753
        %vm756 = vcmp.ne.s32.totalorder %v755, 0
        %vm757 = vcmp.lt.s32.totalorder %v755, 0
        %vm758 = vmand %vm757, %vm756
        %v759 = vadd.s32 %v755, 2
        %v760 = vsel %vm758, %v759, %v755
        %vm761 = vcmp.eq.s32.totalorder %v760, 0
        %p762 = scmp.eq.s32.totalorder %s25, 0
        %s763 = scalar_select %p762, 1, 0
        %v764 = vstv %s763
        %vm765 = vcmp.eq.s32.totalorder %v764, 1
        %vm766 = vmand %vm765, %vm761
        %vm767 = vmxor %vm761, 1
        %vm768 = vmand %vm765, %vm767
        %vm769 = vmor %vm766, %vm768
        %v770 = vsel %vm769, 1, 0
        %vm771 = vcmp.eq.s32.totalorder %v770, 1
        %v772 = vsel %vm771, 0.0, %v744
        %v773 = vsel %vm771, 0.0, %v745
        %v774 = vsel %vm771, 0.0, %v746
        %v776 = vsel %vm331, %v308, 0
        %v779 = vsel %vm331, %v309, 0
        %v782 = vsel %vm331, %v310, 0
        %784 = vmatprep.subr.mxu0 0.0
        %785 = vmatpush1.msra.mxu0 %v545
        %786 = vmatprep.subr.mxu0 0.0
        %787 = vmatpush1.msra.mxu0 %v546
        %788 = vmatprep.subr.mxu0 0.0
        %789 = vmatpush1.msra.mxu0 %v547
        %790 = vmatprep.subr.mxu0 0.0
        %791 = vmatpush1.msra.mxu0 0.0
        %792 = vmatprep.subr.mxu0 0.0
        %793 = vmatpush1.msra.mxu0 0.0
        %794 = vmatprep.subr.mxu0 0.0
        %795 = vmatpush1.msra.mxu0 0.0
        %796 = vmatprep.subr.mxu0 0.0
        %797 = vmatpush1.msra.mxu0 0.0
        %798 = vmatprep.subr.mxu0 0.0
        %799 = vmatpush1.msra.mxu0 0.0
        %800 = vmatprep.subr.mxu0 0.0
        %801 = vmatpush1.msra.mxu0 0.0
        %802 = vmatprep.subr.mxu0 0.0
        %803 = vmatpush1.msra.mxu0 0.0
        %804 = vmatprep.subr.mxu0 0.0
        %805 = vmatpush1.msra.mxu0 0.0
        %806 = vmatprep.subr.mxu0 0.0
        %807 = vmatpush1.msra.mxu0 0.0
        %808 = vmatprep.subr.mxu0 0.0
        %809 = vmatpush1.msra.mxu0 0.0
        %810 = vmatprep.subr.mxu0 0.0
        %811 = vmatpush1.msra.mxu0 0.0
        %812 = vmatprep.subr.mxu0 0.0
        %813 = vmatpush1.msra.mxu0 0.0
        %814 = vmatprep.subr.mxu0 0.0
        %815 = vmatpush1.msra.mxu0 0.0
        %816 = vmatprep.subr.mxu0 0.0
        %817 = vmatpush1.msra.mxu0 0.0
        %818 = vmatprep.subr.mxu0 0.0
        %819 = vmatpush1.msra.mxu0 0.0
        %820 = vmatprep.subr.mxu0 0.0
        %821 = vmatpush1.msra.mxu0 0.0
        %822 = vmatprep.subr.mxu0 0.0
        %823 = vmatpush1.msra.mxu0 0.0
        %824 = vmatprep.subr.mxu0 0.0
        %825 = vmatpush1.msra.mxu0 0.0
        %826 = vmatprep.subr.mxu0 0.0
        %827 = vmatpush1.msra.mxu0 0.0
        %828 = vmatprep.subr.mxu0 0.0
        %829 = vmatpush1.msra.mxu0 0.0
        %830 = vmatprep.subr.mxu0 0.0
        %831 = vmatpush1.msra.mxu0 0.0
        %832 = vmatprep.subr.mxu0 0.0
        %833 = vmatpush1.msra.mxu0 0.0
        %834 = vmatprep.subr.mxu0 0.0
        %835 = vmatpush1.msra.mxu0 0.0
        %836 = vmatprep.subr.mxu0 0.0
        %837 = vmatpush1.msra.mxu0 0.0
        %838 = vmatprep.subr.mxu0 0.0
        %839 = vmatpush1.msra.mxu0 0.0
        %840 = vmatprep.subr.mxu0 0.0
        %841 = vmatpush1.msra.mxu0 0.0
        %842 = vmatprep.subr.mxu0 0.0
        %843 = vmatpush1.msra.mxu0 0.0
        %844 = vmatprep.subr.mxu0 0.0
        %845 = vmatpush1.msra.mxu0 0.0
        %846 = vmatprep.subr.mxu0 0.0
        %847 = vmatpush1.msra.mxu0 0.0
        %848 = vmatprep.mubr.f32.mxu0 0.0
        %849 = vmatmul.mubr.f32.gmra.mrb[0].mxu0 %v776
        %v850 = vpop.f32.mrb[0].mxu0
        %v851 = vadd.f32 0.0, %v850
        %v852 = vpop.f32.mrb[0].mxu0
        %853 = vmatprep.mubr.f32.mxu0 0.0
        %854 = vmatmul.mubr.f32.gmra.mrb[0].mxu0 %v779
        %v855 = vpop.f32.mrb[0].mxu0
        %v856 = vadd.f32 0.0, %v855
        %v857 = vpop.f32.mrb[0].mxu0
        %858 = vmatprep.mubr.f32.mxu0 0.0
        %859 = vmatmul.mubr.f32.gmra.mrb[0].mxu0 %v782
        %v860 = vpop.f32.mrb[0].mxu0
        %v861 = vadd.f32 0.0, %v860
        %v862 = vpop.f32.mrb[0].mxu0
        %863 = vdwg.mxu0
        %864 = vmatprep.subr.mxu0 0.0
        %865 = vmatpush1.msra.mxu0 %v772
        %866 = vmatprep.subr.mxu0 0.0
        %867 = vmatpush1.msra.mxu0 %v773
        %868 = vmatprep.subr.mxu0 0.0
        %869 = vmatpush1.msra.mxu0 %v774
        %870 = vmatprep.subr.mxu0 0.0
        %871 = vmatpush1.msra.mxu0 0.0
        %872 = vmatprep.subr.mxu0 0.0
        %873 = vmatpush1.msra.mxu0 0.0
        %874 = vmatprep.subr.mxu0 0.0
        %875 = vmatpush1.msra.mxu0 0.0
        %876 = vmatprep.subr.mxu0 0.0
        %877 = vmatpush1.msra.mxu0 0.0
        %878 = vmatprep.subr.mxu0 0.0
        %879 = vmatpush1.msra.mxu0 0.0
        %880 = vmatprep.subr.mxu0 0.0
        %881 = vmatpush1.msra.mxu0 0.0
        %882 = vmatprep.subr.mxu0 0.0
        %883 = vmatpush1.msra.mxu0 0.0
        %884 = vmatprep.subr.mxu0 0.0
        %885 = vmatpush1.msra.mxu0 0.0
        %886 = vmatprep.subr.mxu0 0.0
        %887 = vmatpush1.msra.mxu0 0.0
        %888 = vmatprep.subr.mxu0 0.0
        %889 = vmatpush1.msra.mxu0 0.0
        %890 = vmatprep.subr.mxu0 0.0
        %891 = vmatpush1.msra.mxu0 0.0
        %892 = vmatprep.subr.mxu0 0.0
        %893 = vmatpush1.msra.mxu0 0.0
        %894 = vmatprep.subr.mxu0 0.0
        %895 = vmatpush1.msra.mxu0 0.0
        %896 = vmatprep.subr.mxu0 0.0
        %897 = vmatpush1.msra.mxu0 0.0
        %898 = vmatprep.subr.mxu0 0.0
        %899 = vmatpush1.msra.mxu0 0.0
        %900 = vmatprep.subr.mxu0 0.0
        %901 = vmatpush1.msra.mxu0 0.0
        %902 = vmatprep.subr.mxu0 0.0
        %903 = vmatpush1.msra.mxu0 0.0
        %904 = vmatprep.subr.mxu0 0.0
        %905 = vmatpush1.msra.mxu0 0.0
        %906 = vmatprep.subr.mxu0 0.0
        %907 = vmatpush1.msra.mxu0 0.0
        %908 = vmatprep.subr.mxu0 0.0
        %909 = vmatpush1.msra.mxu0 0.0
        %910 = vmatprep.subr.mxu0 0.0
        %911 = vmatpush1.msra.mxu0 0.0
        %912 = vmatprep.subr.mxu0 0.0
        %913 = vmatpush1.msra.mxu0 0.0
        %914 = vmatprep.subr.mxu0 0.0
        %915 = vmatpush1.msra.mxu0 0.0
        %916 = vmatprep.subr.mxu0 0.0
        %917 = vmatpush1.msra.mxu0 0.0
        %918 = vmatprep.subr.mxu0 0.0
        %919 = vmatpush1.msra.mxu0 0.0
        %920 = vmatprep.subr.mxu0 0.0
        %921 = vmatpush1.msra.mxu0 0.0
        %922 = vmatprep.subr.mxu0 0.0
        %923 = vmatpush1.msra.mxu0 0.0
        %924 = vmatprep.subr.mxu0 0.0
        %925 = vmatpush1.msra.mxu0 0.0
        %926 = vmatprep.subr.mxu0 0.0
        %927 = vmatpush1.msra.mxu0 0.0
        %928 = vmatprep.mubr.f32.mxu0 0.0
        %929 = vmatmul.mubr.f32.gmra.mrb[0].mxu0 %v776
        %v930 = vpop.f32.mrb[0].mxu0
        %v931 = vadd.f32 0.0, %v930
        %v932 = vpop.f32.mrb[0].mxu0
        %933 = vmatprep.mubr.f32.mxu0 0.0
        %934 = vmatmul.mubr.f32.gmra.mrb[0].mxu0 %v779
        %v935 = vpop.f32.mrb[0].mxu0
        %v936 = vpop.f32.mrb[0].mxu0
        %937 = vmatprep.mubr.f32.mxu0 0.0
        %938 = vmatmul.mubr.f32.gmra.mrb[0].mxu0 %v782
        %v939 = vpop.f32.mrb[0].mxu0
        %v940 = vadd.f32 0.0, %v939
        %v941 = vpop.f32.mrb[0].mxu0
        %942 = vdwg.mxu0
        %944 = vrot.lane.b32.xlu0 %v851, 1
        %v945 = vpop.permute.xlu0 %944
        %v947 = vsel %vm321, %v931, %v945
        %949 = vrot.lane.b32.xlu0 %v861, 127
        %v950 = vpop.permute.xlu0 %949
        %953 = vrot.lane.b32.xlu0 %v940, 14
        %v954 = vpop.permute.xlu0 %953
        %v956 = vsel %vm329, %v950, %v954
        %v957 = vadd.f32 %v947, %v856
        %v958 = vadd.f32 %v957, %v956
        %vm959 = vcmp.gt.f32.partialorder %v958, 0.0
        %v960 = vmin.f32 %v958, 0.0
        %v961 = vmul.f32 %v960, 1.442695
        %v962 = vpow.pop %v961
        %v963 = vsub.f32 %v962, 1.0
        %v964 = vsel %vm959, %v958, %v963
        %v965 = vadd.f32 %v964, %v311
        %966 = vst.msk [vmem:[%s285] sm:$0xff] %vm440, %v965
        %s967 = sand.u32 %s182, 1
        %s968 = scalar_lea.sflag [#allocation3], %s967
        %s969 = sand.u32 %s182, 1
        %s970 = smul.addr %s969, 8
        %s971 = scalar_lea.vmem [#allocation2], %s970
        // Predicated region
        $region45: #{tpu_custom_call.1} parent=43 // pred_check
          %p972 = pneg %p192
        $region46: #{tpu_custom_call.1} parent=43 // pred_check_branch
          %974 = sbr.rel (%p972) target = $region48
        $region47: #{tpu_custom_call.1} parent=43 // pred_region
          %s976 = ssub.s32 128, 128
          %977 = vsyncadd %s968, %s976
          %s978 = sadd.s32 %s25, %s24
          %s979 = smul.addr %s978, 128
          %s980 = scalar_lea.hbm %s6, %s979
          %s982 = sshll.u32 %s971, 4
          %s983 = int_to_ptr.vmem [resolvable:$true] %s982
          %985 = dma.vmem_to_hbm [thread:$0]  %s983, 128, %s980, %s968
        $region48: #{tpu_custom_call.1} parent=43 // pred_fallthru
          _
      $region44: #{tpu_custom_call.1} parent=5 // pred_fallthru
        _
      %p986 = scmp.le.s32.totalorder 2, %s15
      // Predicated region
      $region49: #{tpu_custom_call.1} parent=5 // pred_check
        %p987 = pneg %p986
      $region50: #{tpu_custom_call.1} parent=5 // pred_check_branch
        %989 = sbr.rel (%p987) target = $region52
      $region51: #{tpu_custom_call.1} parent=5 // pred_region
        %s990 = ssub.s32 %s15, 2
        // Predicated region
        $region53: #{tpu_custom_call.1} parent=51 // pred_check
          %p991 = pneg %p198
        $region54: #{tpu_custom_call.1} parent=51 // pred_check_branch
          %993 = sbr.rel (%p991) target = $region56
        $region55: #{tpu_custom_call.1} parent=51 // pred_region
          %s994 = sand.u32 %s183, 1
          %s995 = scalar_lea.sflag [#allocation3], %s994
          %s996 = sand.u32 %s183, 1
          %s997 = smul.addr %s996, 8
          %s998 = scalar_lea.vmem [#allocation2], %s997
          %999 = dma.done %s995, 128
        $region56: #{tpu_custom_call.1} parent=51 // pred_fallthru
          _
      $region52: #{tpu_custom_call.1} parent=5 // pred_fallthru
        _
    $region6: #{tpu_custom_call.1} parent=1 // loop_footer
      %s19 = sadd.s32 1, %s15
    $region7: #{tpu_custom_call.1} parent=1 // loop_footer_branch
      %14 = sbr.rel target = $region3
    $region8: #{tpu_custom_call.1} parent=1 // loop_exit
      _
    %1000 = vsyncpa [#allocation3], 1
    %s1001 = scalar_lea.sflag [#allocation3], 1
    %1002 = vsyncpa %s1001, 1

</llo_original>
